<compile_context>
chip_gen: v5e
topology: v5e:2x2
jax: 0.10.0
libtpu: 0.0.40
codegen_flags: <defaults>
</compile_context>

<pallas_src>
import jax
import jax.numpy as jnp
from jax.experimental import pallas as pl
from jax.experimental.pallas import tpu as pltpu

_LOSS_LANES = 128   # lane 0 = nll*valid, lane 1 = valid, rest zero-padded
_ROW_ALIGN = 16     # row-tile alignment (bf16 sublane tile)


def _round_up(x, m):
    return ((x + m - 1) // m) * m


def _gccre_kernel(ids_ref, table_ref, ln_g_ref, ln_b_ref, fc_w_ref, fc_b_ref,
                  out_ref, part_ref):
    ids = ids_ref[...]                                 # (TM, 1) int32; pad = -1
    tm = ids.shape[0]
    v = table_ref.shape[0]

    # One-hot built once, directly in bf16 (padded rows: id=-1 -> all-zero row).
    iota_v = jax.lax.broadcasted_iota(jnp.int32, (tm, v), 1)
    onehot = (ids == iota_v).astype(jnp.bfloat16)      # (TM, V)

    # Single fused lookup matmul: lanes [0,128) = [nll*valid, valid, 0...],
    # lanes [128, 128+dtok) = [char | gccre] embedding.  f32 accumulation.
    fused = jnp.dot(onehot, table_ref[...], preferred_element_type=jnp.float32)

    # Masked-CE partials for this tile: one sublane reduction, lane-dense store.
    part = jnp.sum(fused[:, :_LOSS_LANES], axis=0, keepdims=True)   # (1, 128)
    part_ref[0] = jnp.broadcast_to(part, (8, _LOSS_LANES))

    emb = fused[:, _LOSS_LANES:]                       # (TM, dtok) f32

    # LayerNorm over token_size (f32 math).
    mu = jnp.mean(emb, axis=-1, keepdims=True)
    var = jnp.mean((emb - mu) ** 2, axis=-1, keepdims=True)
    emb_ln = (emb - mu) * jax.lax.rsqrt(var + 1e-5)
    emb_ln = emb_ln * ln_g_ref[...] + ln_b_ref[...]

    # fc_merge: relu(Linear(token_size -> output_size)).
    h = jnp.dot(emb_ln.astype(jnp.bfloat16), fc_w_ref[...],
                preferred_element_type=jnp.float32) + fc_b_ref[...]
    out_ref[...] = jnp.maximum(h, 0.0).astype(out_ref.dtype)


def gccre_embedding(ids, char_w, gccre_w, clf_w, clf_b, valid_vec,
                    ln_g, ln_b, fc_w, fc_b, *, tile_m=1024,
                    out_dtype=jnp.bfloat16):
    """ids: (B, S) int32. Returns ((B, S, output_size), scalar f32 loss)."""
    b, s = ids.shape
    n = b * s
    v, dc = char_w.shape
    dtok = dc + gccre_w.shape[1]
    dout = fc_w.shape[1]

    # ---- Hoisted eval-mode masked cross-entropy (weights frozen): logits
    # depend only on the token id, so precompute the per-id masked nll once.
    table_f32 = jnp.concatenate([char_w, gccre_w], axis=1)       # (V, dtok)
    logit_tab = table_f32 @ clf_w + clf_b                        # (V, V)
    lse = jax.scipy.special.logsumexp(logit_tab, axis=-1)        # (V,)
    tgt = jnp.diagonal(logit_tab)                                # (V,)
    valid = valid_vec.reshape(-1).astype(jnp.float32)            # (V,)
    nll_masked = (lse - tgt) * valid                             # (V,)

    # Loss block FIRST (128 lanes), embedding table after — keeps the in-kernel
    # emb slice on a 128-lane boundary for any dtok.
    loss_cols = jnp.zeros((v, _LOSS_LANES), jnp.float32)
    loss_cols = loss_cols.at[:, 0].set(nll_masked).at[:, 1].set(valid)
    aug_table = jnp.concatenate([loss_cols, table_f32],
                                axis=1).astype(jnp.bfloat16)     # (V, 128+dtok)
    fc_w_b = fc_w.astype(jnp.bfloat16)

    # ---- Row tiling: big tiles to amortize per-step overhead and push the
    # output stream toward the HBM roofline, but keep num_tiles >= 2 so both
    # v7x TensorCores get work on the "parallel" axis.
    half = _round_up(pl.cdiv(n, 2), _ROW_ALIGN)
    tile_m = _round_up(max(_ROW_ALIGN, min(tile_m, half)), _ROW_ALIGN)
    n_pad = _round_up(n, tile_m)
    num_tiles = n_pad // tile_m

    ids_flat = ids.reshape(n, 1).astype(jnp.int32)
    if n_pad != n:
        # Pad with -1: matches no vocab row -> zero embedding, zero loss terms.
        ids_flat = jnp.pad(ids_flat, ((0, n_pad - n), (0, 0)),
                           constant_values=-1)

    out_bytes = jnp.dtype(out_dtype).itemsize

    # ---- VMEM budget computed from actual buffers (+2x headroom), not 48 MiB.
    resident_bytes = (aug_table.size * 2 + fc_w_b.size * 2
                      + (ln_g.size + ln_b.size + fc_b.size) * 4)
    io_tile_bytes = (tile_m * 4                      # ids tile
                     + tile_m * dout * out_bytes     # out tile
                     + 8 * _LOSS_LANES * 4)          # partials tile
    interm_bytes = tile_m * (v * 2                   # one-hot (bf16)
                             + (_LOSS_LANES + dtok) * 4   # fused f32
                             + dtok * 4 * 2 + dout * 4)   # LN / fc temporaries
    vmem_limit = int(min(64 * 1024 * 1024,
                         max(16 * 1024 * 1024,
                             2 * (2 * resident_bytes + 2 * io_tile_bytes
                                  + interm_bytes))))

    flops = 2 * n_pad * (v * (_LOSS_LANES + dtok) + dtok * dout)
    transcendentals = n_pad                          # rsqrt per row
    bytes_accessed = (n_pad * 4 + resident_bytes
                      + n_pad * dout * out_bytes
                      + num_tiles * 8 * _LOSS_LANES * 4)

    def resident(shape):
        return pl.BlockSpec(shape, lambda i: (0,) * len(shape))

    out, part = pl.pallas_call(
        _gccre_kernel,
        grid=(num_tiles,),
        in_specs=[
            pl.BlockSpec((tile_m, 1), lambda i: (i, 0)),   # ids (row-tiled)
            resident((v, _LOSS_LANES + dtok)),             # fused table (bf16)
            resident((1, dtok)),                           # layernorm gamma
            resident((1, dtok)),                           # layernorm beta
            resident((dtok, dout)),                        # fc_concat w (bf16)
            resident((1, dout)),                           # fc_concat bias
        ],
        out_specs=(
            pl.BlockSpec((tile_m, dout), lambda i: (i, 0)),
            pl.BlockSpec((1, 8, _LOSS_LANES), lambda i: (i, 0, 0)),
        ),
        out_shape=(
            jax.ShapeDtypeStruct((n_pad, dout), out_dtype),
            jax.ShapeDtypeStruct((num_tiles, 8, _LOSS_LANES), jnp.float32),
        ),
        compiler_params=pltpu.CompilerParams(
            dimension_semantics=("parallel",),
            vmem_limit_bytes=vmem_limit,
        ),
        cost_estimate=pl.CostEstimate(
            flops=flops,
            transcendentals=transcendentals,
            bytes_accessed=bytes_accessed,
        ),
    )(ids_flat, aug_table, ln_g, ln_b, fc_w_b, fc_b)

    num_total = jnp.sum(part[:, 0, 0])
    den_total = jnp.sum(part[:, 0, 1])
    loss = num_total / jnp.maximum(den_total, 1.0)
    return out[:n].reshape(b, s, dout), loss


if __name__ == "__main__":
    # Small, TPU-friendly sizes consistent with the module.
    B, S = 2, 16                # data: (B, S) token ids
    V = 128                     # len(idx2char)
    CHAR_EMB = 64               # char_embsize
    GCCRE_EMB = 64              # gccre_embsize
    TOKEN = CHAR_EMB + GCCRE_EMB
    OUT = 128                   # output_size (fc_merge=True)

    key = jax.random.PRNGKey(0)
    ks = jax.random.split(key, 6)

    ids = jax.random.randint(ks[0], (B, S), 0, V, dtype=jnp.int32)

    # init_weights: uniform(-0.1, 0.1) embeddings; small deterministic linears
    char_w = jax.random.uniform(ks[1], (V, CHAR_EMB), jnp.float32, -0.1, 0.1)
    gccre_w = jax.random.uniform(ks[2], (V, GCCRE_EMB), jnp.float32, -0.1, 0.1)
    clf_w = jax.random.normal(ks[3], (TOKEN, V), jnp.float32) * 0.05
    clf_b = jnp.zeros((1, V), jnp.float32)
    ln_g = jnp.ones((1, TOKEN), jnp.float32)
    ln_b = jnp.zeros((1, TOKEN), jnp.float32)
    fc_w = jax.random.normal(ks[4], (TOKEN, OUT), jnp.float32) * 0.05
    fc_b = jnp.zeros((1, OUT), jnp.float32)

    # loss_mask_ids = [0] (e.g. PAD id excluded from the gccre loss)
    valid_vec = jnp.ones((1, V), jnp.float32).at[0, 0].set(0.0)

    # n=32 rows -> tile_m is capped to 16, num_tiles=2: exercises the per-tile
    # loss-partial accumulation and the two-TC "parallel" split; at realistic
    # sizes the default tile_m=1024 applies.
    emb_out, gccre_loss = gccre_embedding(
        ids, char_w, gccre_w, clf_w, clf_b, valid_vec, ln_g, ln_b, fc_w, fc_b)
    jax.block_until_ready((emb_out, gccre_loss))

    # Pure-JAX f32 reference (bf16 operands / bf16 output => loose tolerance).
    table_f32 = jnp.concatenate([char_w, gccre_w], axis=1)
    ids_f = ids.reshape(-1)
    emb_r = table_f32[ids_f]
    logits_r = emb_r @ clf_w + clf_b
    lse_r = jax.scipy.special.logsumexp(logits_r, axis=-1)
    tgt_r = jnp.take_along_axis(logits_r, ids_f[:, None], axis=-1)[:, 0]
    nll_r = lse_r - tgt_r
    valid_r = valid_vec[0, ids_f]
    loss_r = jnp.sum(nll_r * valid_r) / jnp.maximum(jnp.sum(valid_r), 1.0)
    mu_r = emb_r.mean(-1, keepdims=True)
    var_r = ((emb_r - mu_r) ** 2).mean(-1, keepdims=True)
    emb_ln_r = (emb_r - mu_r) * jax.lax.rsqrt(var_r + 1e-5) * ln_g + ln_b
    out_r = jnp.maximum(emb_ln_r @ fc_w + fc_b, 0.0).reshape(B, S, OUT)

    assert emb_out.shape == (B, S, OUT)
    assert jnp.isfinite(gccre_loss)
    assert jnp.allclose(emb_out.astype(jnp.float32), out_r, atol=3e-2, rtol=3e-2)
    assert jnp.allclose(gccre_loss, loss_r, atol=3e-2, rtol=3e-2)
    print("KERNEL_OK")
</pallas_src>

<mosaic_0001>
module attributes {stable_mosaic.version = 11 : i64} {
  func.func @_gccre_kernel(%arg0: i32, %arg1: memref<16x1xi32, #tpu.memory_space<vmem>>, %arg2: memref<128x256xbf16, #tpu.memory_space<vmem>>, %arg3: memref<1x128xf32, #tpu.memory_space<vmem>>, %arg4: memref<1x128xf32, #tpu.memory_space<vmem>>, %arg5: memref<128x128xbf16, #tpu.memory_space<vmem>>, %arg6: memref<1x128xf32, #tpu.memory_space<vmem>>, %arg7: memref<16x128xbf16, #tpu.memory_space<vmem>>, %arg8: memref<1x8x128xf32, #tpu.memory_space<vmem>>) attributes {dimension_semantics = [#tpu.dimension_semantics<parallel>], iteration_bounds = array<i64: 2>, scalar_prefetch = 0 : i64, scratch_operands = 0 : i64, tpu.core_type = #tpu.core_type<tc>, window_params = [{transform_indices = @transform_0, window_bounds = array<i64: 16, 1>}, {pipeline_mode = #tpu.pipeline_mode<synchronous>, transform_indices = @transform_1, window_bounds = array<i64: 128, 256>}, {pipeline_mode = #tpu.pipeline_mode<synchronous>, transform_indices = @transform_2, window_bounds = array<i64: 1, 128>}, {pipeline_mode = #tpu.pipeline_mode<synchronous>, transform_indices = @transform_3, window_bounds = array<i64: 1, 128>}, {pipeline_mode = #tpu.pipeline_mode<synchronous>, transform_indices = @transform_4, window_bounds = array<i64: 128, 128>}, {pipeline_mode = #tpu.pipeline_mode<synchronous>, transform_indices = @transform_5, window_bounds = array<i64: 1, 128>}, {transform_indices = @transform_6, window_bounds = array<i64: 16, 128>}, {transform_indices = @transform_7, window_bounds = array<i64: 1, 8, 128>}]} {
    %c0 = arith.constant 0 : index
    %c0_0 = arith.constant 0 : index
    %0 = vector.load %arg1[%c0, %c0_0] : memref<16x1xi32, #tpu.memory_space<vmem>>, vector<16x1xi32>
    %1 = tpu.iota {dimensions = array<i32: 1>} : vector<16x128xi32>
    %2 = vector.broadcast %0 : vector<16x1xi32> to vector<16x128xi32>
    %3 = arith.cmpi eq, %2, %1 : vector<16x128xi32>
    %4 = arith.extui %3 : vector<16x128xi1> to vector<16x128xi32>
    %5 = arith.sitofp %4 : vector<16x128xi32> to vector<16x128xf32>
    %6 = arith.truncf %5 : vector<16x128xf32> to vector<16x128xbf16>
    %c0_1 = arith.constant 0 : index
    %c0_2 = arith.constant 0 : index
    %7 = vector.load %arg2[%c0_1, %c0_2] : memref<128x256xbf16, #tpu.memory_space<vmem>>, vector<128x256xbf16>
    %cst = arith.constant dense<0.000000e+00> : vector<16x256xf32>
    %8 = tpu.matmul %6, %7, %cst {dimension_numbers = #tpu.dot_dimension_numbers<[1], [0], [0], [1], [0, 0, 1, 1], [], []>} : vector<16x128xbf16>, vector<128x256xbf16>, vector<16x256xf32> -> vector<16x256xf32>
    %9 = vector.extract_strided_slice %8 {offsets = [0, 0], sizes = [16, 128], strides = [1, 1]} : vector<16x256xf32> to vector<16x128xf32>
    %cst_3 = arith.constant dense<0.000000e+00> : vector<128xf32>
    %10 = vector.multi_reduction <add>, %9, %cst_3 [0] : vector<16x128xf32> to vector<128xf32>
    %11 = vector.shape_cast %10 : vector<128xf32> to vector<1x128xf32>
    %12 = vector.shape_cast %11 : vector<1x128xf32> to vector<1x128xf32>
    %13 = vector.broadcast %12 : vector<1x128xf32> to vector<8x128xf32>
    %c0_4 = arith.constant 0 : index
    %c0_5 = arith.constant 0 : index
    %c0_6 = arith.constant 0 : index
    %14 = vector.load %arg8[%c0_4, %c0_5, %c0_6] : memref<1x8x128xf32, #tpu.memory_space<vmem>>, vector<1x8x128xf32>
    %15 = vector.shape_cast %14 : vector<1x8x128xf32> to vector<8x128xf32>
    %16 = vector.shape_cast %13 : vector<8x128xf32> to vector<1x8x128xf32>
    tpu.vector_store %arg8[%c0_4, %c0_5, %c0_6], %16 {strides = array<i32>} : memref<1x8x128xf32, #tpu.memory_space<vmem>>, vector<1x8x128xf32>,
    %17 = vector.extract_strided_slice %8 {offsets = [0, 128], sizes = [16, 128], strides = [1, 1]} : vector<16x256xf32> to vector<16x128xf32>
    %cst_7 = arith.constant dense<0.000000e+00> : vector<16xf32>
    %18 = vector.multi_reduction <add>, %17, %cst_7 [1] : vector<16x128xf32> to vector<16xf32>
    %19 = vector.shape_cast %18 : vector<16xf32> to vector<16x1xf32>
    %cst_8 = arith.constant 1.280000e+02 : f32
    %20 = vector.broadcast %cst_8 : f32 to vector<16x1xf32>
    %21 = arith.divf %19, %20 : vector<16x1xf32>
    %22 = vector.broadcast %21 : vector<16x1xf32> to vector<16x128xf32>
    %23 = arith.subf %17, %22 : vector<16x128xf32>
    %24 = arith.mulf %23, %23 : vector<16x128xf32>
    %cst_9 = arith.constant dense<0.000000e+00> : vector<16xf32>
    %25 = vector.multi_reduction <add>, %24, %cst_9 [1] : vector<16x128xf32> to vector<16xf32>
    %26 = vector.shape_cast %25 : vector<16xf32> to vector<16x1xf32>
    %cst_10 = arith.constant 1.280000e+02 : f32
    %27 = vector.broadcast %cst_10 : f32 to vector<16x1xf32>
    %28 = arith.divf %26, %27 : vector<16x1xf32>
    %29 = vector.broadcast %21 : vector<16x1xf32> to vector<16x128xf32>
    %30 = arith.subf %17, %29 : vector<16x128xf32>
    %cst_11 = arith.constant 9.99999974E-6 : f32
    %31 = vector.broadcast %cst_11 : f32 to vector<16x1xf32>
    %32 = arith.addf %28, %31 : vector<16x1xf32>
    %33 = math.rsqrt %32 : vector<16x1xf32>
    %34 = vector.broadcast %33 : vector<16x1xf32> to vector<16x128xf32>
    %35 = arith.mulf %30, %34 : vector<16x128xf32>
    %c0_12 = arith.constant 0 : index
    %c0_13 = arith.constant 0 : index
    %36 = vector.load %arg3[%c0_12, %c0_13] : memref<1x128xf32, #tpu.memory_space<vmem>>, vector<1x128xf32>
    %37 = vector.broadcast %36 : vector<1x128xf32> to vector<16x128xf32>
    %38 = arith.mulf %35, %37 : vector<16x128xf32>
    %c0_14 = arith.constant 0 : index
    %c0_15 = arith.constant 0 : index
    %39 = vector.load %arg4[%c0_14, %c0_15] : memref<1x128xf32, #tpu.memory_space<vmem>>, vector<1x128xf32>
    %40 = vector.broadcast %39 : vector<1x128xf32> to vector<16x128xf32>
    %41 = arith.addf %38, %40 : vector<16x128xf32>
    %42 = arith.truncf %41 : vector<16x128xf32> to vector<16x128xbf16>
    %c0_16 = arith.constant 0 : index
    %c0_17 = arith.constant 0 : index
    %43 = vector.load %arg5[%c0_16, %c0_17] : memref<128x128xbf16, #tpu.memory_space<vmem>>, vector<128x128xbf16>
    %cst_18 = arith.constant dense<0.000000e+00> : vector<16x128xf32>
    %44 = tpu.matmul %42, %43, %cst_18 {dimension_numbers = #tpu.dot_dimension_numbers<[1], [0], [0], [1], [0, 0, 1, 1], [], []>} : vector<16x128xbf16>, vector<128x128xbf16>, vector<16x128xf32> -> vector<16x128xf32>
    %c0_19 = arith.constant 0 : index
    %c0_20 = arith.constant 0 : index
    %45 = vector.load %arg6[%c0_19, %c0_20] : memref<1x128xf32, #tpu.memory_space<vmem>>, vector<1x128xf32>
    %46 = vector.broadcast %45 : vector<1x128xf32> to vector<16x128xf32>
    %47 = arith.addf %44, %46 : vector<16x128xf32>
    %cst_21 = arith.constant 0.000000e+00 : f32
    %48 = vector.broadcast %cst_21 : f32 to vector<16x128xf32>
    %49 = arith.maximumf %47, %48 : vector<16x128xf32>
    %50 = arith.truncf %49 : vector<16x128xf32> to vector<16x128xbf16>
    %c0_22 = arith.constant 0 : index
    %c0_23 = arith.constant 0 : index
    %51 = vector.load %arg7[%c0_22, %c0_23] : memref<16x128xbf16, #tpu.memory_space<vmem>>, vector<16x128xbf16>
    tpu.vector_store %arg7[%c0_22, %c0_23], %50 {strides = array<i32>} : memref<16x128xbf16, #tpu.memory_space<vmem>>, vector<16x128xbf16>,
    return
  }
  func.func @transform_0(%arg0: i32) -> (i32, i32) {
    %c0_i32 = arith.constant 0 : i32
    %c0_i32_0 = arith.constant 0 : i32
    return %arg0, %c0_i32 : i32, i32
  }
  func.func @transform_1(%arg0: i32) -> (i32, i32) {
    %c0_i32 = arith.constant 0 : i32
    %c0_i32_0 = arith.constant 0 : i32
    %c0_i32_1 = arith.constant 0 : i32
    return %c0_i32, %c0_i32_0 : i32, i32
  }
  func.func @transform_2(%arg0: i32) -> (i32, i32) {
    %c0_i32 = arith.constant 0 : i32
    %c0_i32_0 = arith.constant 0 : i32
    %c0_i32_1 = arith.constant 0 : i32
    return %c0_i32, %c0_i32_0 : i32, i32
  }
  func.func @transform_3(%arg0: i32) -> (i32, i32) {
    %c0_i32 = arith.constant 0 : i32
    %c0_i32_0 = arith.constant 0 : i32
    %c0_i32_1 = arith.constant 0 : i32
    return %c0_i32, %c0_i32_0 : i32, i32
  }
  func.func @transform_4(%arg0: i32) -> (i32, i32) {
    %c0_i32 = arith.constant 0 : i32
    %c0_i32_0 = arith.constant 0 : i32
    %c0_i32_1 = arith.constant 0 : i32
    return %c0_i32, %c0_i32_0 : i32, i32
  }
  func.func @transform_5(%arg0: i32) -> (i32, i32) {
    %c0_i32 = arith.constant 0 : i32
    %c0_i32_0 = arith.constant 0 : i32
    %c0_i32_1 = arith.constant 0 : i32
    return %c0_i32, %c0_i32_0 : i32, i32
  }
  func.func @transform_6(%arg0: i32) -> (i32, i32) {
    %c0_i32 = arith.constant 0 : i32
    %c0_i32_0 = arith.constant 0 : i32
    return %arg0, %c0_i32 : i32, i32
  }
  func.func @transform_7(%arg0: i32) -> (i32, i32, i32) {
    %c0_i32 = arith.constant 0 : i32
    %c0_i32_0 = arith.constant 0 : i32
    %c0_i32_1 = arith.constant 0 : i32
    return %arg0, %c0_i32, %c0_i32_0 : i32, i32, i32
  }
}

</mosaic_0001>

<llo_original>
// kernel: tpu_custom_call.1
$region0: #{tpu_custom_call.1}
  #allocation0 [shape = 'u32[]', space=smem, size = 0x4, offset = 0x4, fixed_abs, tag = 'smem constant byte address 0x4 - core index']
  #allocation1 [shape = 'u32[72,128]{1,0:T(1,128)}', space=vmem, size = 0x9000, scoped, tag = 'internal scratch']
  %s0 = inlined_call_operand.vmem [shape: s32[32,1], index: 0, kind: input, shape index: {}]
  %s1 = inlined_call_operand.hbm [shape: bf16[128,256], index: 1, kind: input, shape index: {}]
  %s2 = inlined_call_operand.vmem [shape: f32[1,128], index: 2, kind: input, shape index: {}]
  %s3 = inlined_call_operand.vmem [shape: f32[1,128], index: 3, kind: input, shape index: {}]
  %s4 = inlined_call_operand.hbm [shape: bf16[128,128], index: 4, kind: input, shape index: {}]
  %s5 = inlined_call_operand.vmem [shape: f32[1,128], index: 5, kind: input, shape index: {}]
  %s6 = inlined_call_operand.hbm [shape: bf16[32,128], index: 6, kind: output, shape index: {0}]
  %s7 = inlined_call_operand.hbm [shape: f32[2,8,128], index: 7, kind: output, shape index: {1}]
  %8 = xla_tuple %s6, %s7
  %s9 = sld [smem:[#allocation0]]
  $region73: #{tpu_custom_call.1} parent=0
    _
  %s11 = ssub.s32 1, %s9
  %s12 = scalar_select 0, %s11, %s9
  $region1: #{tpu_custom_call.1} parent=0
    #allocation2 [shape = 'u8[65536]{0}', space=vmem, size = 0x10000, scoped, tag = 'input window, operand 1, single buffered']
    #allocation3 [shape = 's32[2]{0}', space=sflag, size = 0x8, scoped, tag = 'scoped memory for tpu_custom_call.1']
    #allocation4 [shape = 's32[2]{0}', space=sflag, size = 0x8, scoped, tag = 'scoped memory for tpu_custom_call.1']
    #allocation5 [shape = 'u8[32768]{0}', space=vmem, size = 0x8000, scoped, tag = 'input window, operand 4, single buffered']
    #allocation6 [shape = 's32[1]{0}', space=sflag, size = 0x4, scoped, tag = 'scoped memory for tpu_custom_call.1']
    #allocation7 [shape = 'u8[8192]{0}', space=vmem, size = 0x2000, scoped, tag = 'output window, operand 0']
    #allocation8 [shape = 'u8[8192]{0}', space=vmem, size = 0x2000, scoped, tag = 'output window, operand 1']
    #allocation9 [shape = 's32[2]{0}', space=sflag, size = 0x8, scoped, tag = 'scoped memory for tpu_custom_call.1']
    %13 = vsyncpa [#allocation3], 0
    %14 = vsyncpa [#allocation6], 0
    %15 = vsyncpa [#allocation4], 0
    %s16 = scalar_lea.sflag [#allocation4], 1
    %17 = vsyncpa %s16, 0
    %18 = vsyncpa [#allocation9], 0
    %s19 = scalar_lea.sflag [#allocation9], 1
    %20 = vsyncpa %s19, 0
    loop: start=0, step=1, limit=4
    $region2: #{tpu_custom_call.1} parent=1 // loop_pre_header
      _
    $region3: #{tpu_custom_call.1} parent=1 // loop_header
      %s22 = sphi 0, %s26
      %p23 = scmp.ge.s32.totalorder %s22, 4
      %s32 = sphi 0, %s34
      %s35 = sphi 0, %s32
      %s36 = sphi 0, %s35
      %s52 = sphi 0, %s36
      %s56 = sphi 0, %s56
      %s58 = sphi 0, %s56
      %s59 = sphi 0, %s58
      %s73 = sphi 0, %s59
      %s77 = sphi 0, %s77
      %s79 = sphi 0, %s77
      %s80 = sphi 0, %s79
      %s94 = sphi 0, %s80
      %s98 = sphi 0, %s98
      %s100 = sphi 0, %s98
      %s101 = sphi 0, %s100
      %s115 = sphi 0, %s101
      %s119 = sphi 0, %s119
      %s121 = sphi 0, %s119
      %s122 = sphi 0, %s121
      %s136 = sphi 0, %s122
      %s140 = sphi 0, %s140
      %s142 = sphi 0, %s140
      %s143 = sphi 0, %s142
      %s157 = sphi 0, %s143
      %s163 = sphi 0, %s165
      %s166 = sphi 0, %s163
      %s167 = sphi 0, %s166
      %s183 = sphi 0, %s167
      %s189 = sphi 0, %s191
      %s192 = sphi 0, %s189
      %s193 = sphi 0, %s192
      %s209 = sphi 0, %s193
    $region4: #{tpu_custom_call.1} parent=1 // loop_header_branch
      %25 = sbr.rel (%p23) target = $region8
    $region5: #{tpu_custom_call.1} parent=1 // loop_body
      %s27 = ssub.s32 %s22, 1
      %s28 = ssub.s32 %s22, 2
      %s29 = sadd.s32 %s22, 1
      %s30 = ssub.s32 %s22, %s29
      %p31 = scmp.eq.s32.totalorder %s30, 0
      %s33 = sadd.s32 %s32, 1
      %s34 = scalar_select %p31, %s32, %s33
      %p37 = pneg %p31
      %p38 = scmp.eq.s32.totalorder %s22, 1
      %p39 = por %p37, %p38
      %p40 = scmp.ne.s32.totalorder %s32, %s35
      %p41 = scmp.eq.s32.totalorder %s22, 0
      %p42 = por %p40, %p41
      %p43 = scmp.ne.s32.totalorder %s32, %s35
      %p44 = scmp.eq.s32.totalorder %s27, 1
      %p45 = por %p43, %p44
      %p46 = scmp.ne.s32.totalorder %s35, %s36
      %p47 = scmp.eq.s32.totalorder %s27, 0
      %p48 = por %p46, %p47
      %p49 = scmp.ne.s32.totalorder %s35, %s36
      %p50 = scmp.eq.s32.totalorder %s28, 1
      %p51 = por %p49, %p50
      %p53 = scmp.ne.s32.totalorder %s36, %s52
      %p54 = scmp.eq.s32.totalorder %s28, 0
      %p55 = por %p53, %p54
      %s57 = sadd.s32 %s56, 1
      %p60 = scmp.eq.s32.totalorder %s22, 1
      %p61 = scmp.ne.s32.totalorder %s56, %s58
      %p62 = scmp.eq.s32.totalorder %s22, 0
      %p63 = por %p61, %p62
      %p64 = scmp.ne.s32.totalorder %s56, %s58
      %p65 = scmp.eq.s32.totalorder %s27, 1
      %p66 = por %p64, %p65
      %p67 = scmp.ne.s32.totalorder %s58, %s59
      %p68 = scmp.eq.s32.totalorder %s27, 0
      %p69 = por %p67, %p68
      %p70 = scmp.ne.s32.totalorder %s58, %s59
      %p71 = scmp.eq.s32.totalorder %s28, 1
      %p72 = por %p70, %p71
      %p74 = scmp.ne.s32.totalorder %s59, %s73
      %p75 = scmp.eq.s32.totalorder %s28, 0
      %p76 = por %p74, %p75
      %s78 = sadd.s32 %s77, 1
      %p81 = scmp.eq.s32.totalorder %s22, 1
      %p82 = scmp.ne.s32.totalorder %s77, %s79
      %p83 = scmp.eq.s32.totalorder %s22, 0
      %p84 = por %p82, %p83
      %p85 = scmp.ne.s32.totalorder %s77, %s79
      %p86 = scmp.eq.s32.totalorder %s27, 1
      %p87 = por %p85, %p86
      %p88 = scmp.ne.s32.totalorder %s79, %s80
      %p89 = scmp.eq.s32.totalorder %s27, 0
      %p90 = por %p88, %p89
      %p91 = scmp.ne.s32.totalorder %s79, %s80
      %p92 = scmp.eq.s32.totalorder %s28, 1
      %p93 = por %p91, %p92
      %p95 = scmp.ne.s32.totalorder %s80, %s94
      %p96 = scmp.eq.s32.totalorder %s28, 0
      %p97 = por %p95, %p96
      %s99 = sadd.s32 %s98, 1
      %p102 = scmp.eq.s32.totalorder %s22, 1
      %p103 = scmp.ne.s32.totalorder %s98, %s100
      %p104 = scmp.eq.s32.totalorder %s22, 0
      %p105 = por %p103, %p104
      %p106 = scmp.ne.s32.totalorder %s98, %s100
      %p107 = scmp.eq.s32.totalorder %s27, 1
      %p108 = por %p106, %p107
      %p109 = scmp.ne.s32.totalorder %s100, %s101
      %p110 = scmp.eq.s32.totalorder %s27, 0
      %p111 = por %p109, %p110
      %p112 = scmp.ne.s32.totalorder %s100, %s101
      %p113 = scmp.eq.s32.totalorder %s28, 1
      %p114 = por %p112, %p113
      %p116 = scmp.ne.s32.totalorder %s101, %s115
      %p117 = scmp.eq.s32.totalorder %s28, 0
      %p118 = por %p116, %p117
      %s120 = sadd.s32 %s119, 1
      %p123 = scmp.eq.s32.totalorder %s22, 1
      %p124 = scmp.ne.s32.totalorder %s119, %s121
      %p125 = scmp.eq.s32.totalorder %s22, 0
      %p126 = por %p124, %p125
      %p127 = scmp.ne.s32.totalorder %s119, %s121
      %p128 = scmp.eq.s32.totalorder %s27, 1
      %p129 = por %p127, %p128
      %p130 = scmp.ne.s32.totalorder %s121, %s122
      %p131 = scmp.eq.s32.totalorder %s27, 0
      %p132 = por %p130, %p131
      %p133 = scmp.ne.s32.totalorder %s121, %s122
      %p134 = scmp.eq.s32.totalorder %s28, 1
      %p135 = por %p133, %p134
      %p137 = scmp.ne.s32.totalorder %s122, %s136
      %p138 = scmp.eq.s32.totalorder %s28, 0
      %p139 = por %p137, %p138
      %s141 = sadd.s32 %s140, 1
      %p144 = scmp.eq.s32.totalorder %s22, 1
      %p145 = scmp.ne.s32.totalorder %s140, %s142
      %p146 = scmp.eq.s32.totalorder %s22, 0
      %p147 = por %p145, %p146
      %p148 = scmp.ne.s32.totalorder %s140, %s142
      %p149 = scmp.eq.s32.totalorder %s27, 1
      %p150 = por %p148, %p149
      %p151 = scmp.ne.s32.totalorder %s142, %s143
      %p152 = scmp.eq.s32.totalorder %s27, 0
      %p153 = por %p151, %p152
      %p154 = scmp.ne.s32.totalorder %s142, %s143
      %p155 = scmp.eq.s32.totalorder %s28, 1
      %p156 = por %p154, %p155
      %p158 = scmp.ne.s32.totalorder %s143, %s157
      %p159 = scmp.eq.s32.totalorder %s28, 0
      %p160 = por %p158, %p159
      %s161 = ssub.s32 %s22, %s29
      %p162 = scmp.eq.s32.totalorder %s161, 0
      %s164 = sadd.s32 %s163, 1
      %s165 = scalar_select %p162, %s163, %s164
      %p168 = pneg %p162
      %p169 = scmp.eq.s32.totalorder %s22, 1
      %p170 = por %p168, %p169
      %p171 = scmp.ne.s32.totalorder %s163, %s166
      %p172 = scmp.eq.s32.totalorder %s22, 0
      %p173 = por %p171, %p172
      %p174 = scmp.ne.s32.totalorder %s163, %s166
      %p175 = scmp.eq.s32.totalorder %s27, 1
      %p176 = por %p174, %p175
      %p177 = scmp.ne.s32.totalorder %s166, %s167
      %p178 = scmp.eq.s32.totalorder %s27, 0
      %p179 = por %p177, %p178
      %p180 = scmp.ne.s32.totalorder %s166, %s167
      %p181 = scmp.eq.s32.totalorder %s28, 1
      %p182 = por %p180, %p181
      %p184 = scmp.ne.s32.totalorder %s167, %s183
      %p185 = scmp.eq.s32.totalorder %s28, 0
      %p186 = por %p184, %p185
      %s187 = ssub.s32 %s22, %s29
      %p188 = scmp.eq.s32.totalorder %s187, 0
      %s190 = sadd.s32 %s189, 1
      %s191 = scalar_select %p188, %s189, %s190
      %p194 = pneg %p188
      %p195 = scmp.eq.s32.totalorder %s22, 1
      %p196 = por %p194, %p195
      %p197 = scmp.ne.s32.totalorder %s189, %s192
      %p198 = scmp.eq.s32.totalorder %s22, 0
      %p199 = por %p197, %p198
      %p200 = scmp.ne.s32.totalorder %s189, %s192
      %p201 = scmp.eq.s32.totalorder %s27, 1
      %p202 = por %p200, %p201
      %p203 = scmp.ne.s32.totalorder %s192, %s193
      %p204 = scmp.eq.s32.totalorder %s27, 0
      %p205 = por %p203, %p204
      %p206 = scmp.ne.s32.totalorder %s192, %s193
      %p207 = scmp.eq.s32.totalorder %s28, 1
      %p208 = por %p206, %p207
      %p210 = scmp.ne.s32.totalorder %s193, %s209
      %p211 = scmp.eq.s32.totalorder %s28, 0
      %p212 = por %p210, %p211
      %p213 = scmp.le.s32.totalorder 1, %s22
      %p214 = scmp.lt.s32.totalorder %s22, 3
      %p215 = pnand %p213, %p214
      %p216 = pneg %p215
      // Predicated region
      $region9: #{tpu_custom_call.1} parent=5 // pred_check
        _
      $region10: #{tpu_custom_call.1} parent=5 // pred_check_branch
        %218 = sbr.rel (%p215) target = $region12
      $region11: #{tpu_custom_call.1} parent=5 // pred_region
        %s219 = ssub.s32 %s22, 1
        // Predicated region
        $region13: #{tpu_custom_call.1} parent=11 // pred_check
          %p220 = pneg %p69
        $region14: #{tpu_custom_call.1} parent=11 // pred_check_branch
          %222 = sbr.rel (%p220) target = $region16
        $region15: #{tpu_custom_call.1} parent=11 // pred_region
          %224 = vsyncadd [#allocation3], 0
          %s225 = sshll.u32 %s1, 4
          %s226 = int_to_ptr.hbm [resolvable:$true] %s225
          %s227 = sshll.u32 [#allocation2], 4
          %s228 = int_to_ptr.vmem [resolvable:$true] %s227
          %233 = dma.hbm_to_vmem [thread:$0]  %s226, 2048, %s228, [#allocation3], 128, 128, 8
        $region16: #{tpu_custom_call.1} parent=11 // pred_fallthru
          _
        // Predicated region
        $region17: #{tpu_custom_call.1} parent=11 // pred_check
          %p234 = pneg %p90
        $region18: #{tpu_custom_call.1} parent=11 // pred_check_branch
          %236 = sbr.rel (%p234) target = $region20
        $region19: #{tpu_custom_call.1} parent=11 // pred_region
          _
        $region20: #{tpu_custom_call.1} parent=11 // pred_fallthru
          _
        // Predicated region
        $region21: #{tpu_custom_call.1} parent=11 // pred_check
          %p237 = pneg %p111
        $region22: #{tpu_custom_call.1} parent=11 // pred_check_branch
          %239 = sbr.rel (%p237) target = $region24
        $region23: #{tpu_custom_call.1} parent=11 // pred_region
          _
        $region24: #{tpu_custom_call.1} parent=11 // pred_fallthru
          _
        // Predicated region
        $region25: #{tpu_custom_call.1} parent=11 // pred_check
          %p240 = pneg %p132
        $region26: #{tpu_custom_call.1} parent=11 // pred_check_branch
          %242 = sbr.rel (%p240) target = $region28
        $region27: #{tpu_custom_call.1} parent=11 // pred_region
          %244 = vsyncadd [#allocation6], 0
          %s245 = sshll.u32 %s4, 4
          %s246 = int_to_ptr.hbm [resolvable:$true] %s245
          %s247 = sshll.u32 [#allocation5], 4
          %s248 = int_to_ptr.vmem [resolvable:$true] %s247
          %253 = dma.hbm_to_vmem [thread:$0]  %s246, 1024, %s248, [#allocation6], 64, 64, 4
        $region28: #{tpu_custom_call.1} parent=11 // pred_fallthru
          _
        // Predicated region
        $region29: #{tpu_custom_call.1} parent=11 // pred_check
          %p254 = pneg %p153
        $region30: #{tpu_custom_call.1} parent=11 // pred_check_branch
          %256 = sbr.rel (%p254) target = $region32
        $region31: #{tpu_custom_call.1} parent=11 // pred_region
          _
        $region32: #{tpu_custom_call.1} parent=11 // pred_fallthru
          _
      $region12: #{tpu_custom_call.1} parent=5 // pred_fallthru
        _
      %p257 = scmp.lt.s32.totalorder %s22, 2
      // Predicated region
      $region33: #{tpu_custom_call.1} parent=5 // pred_check
        %p258 = pneg %p257
      $region34: #{tpu_custom_call.1} parent=5 // pred_check_branch
        %260 = sbr.rel (%p258) target = $region36
      $region35: #{tpu_custom_call.1} parent=5 // pred_region
        // Predicated region
        $region37: #{tpu_custom_call.1} parent=35 // pred_check
          %p261 = pneg %p42
        $region38: #{tpu_custom_call.1} parent=35 // pred_check_branch
          %263 = sbr.rel (%p261) target = $region40
        $region39: #{tpu_custom_call.1} parent=35 // pred_region
          %s264 = smul.u32 2, %s22
          %p265 = scmp.lt.s32.totalorder %s264, 3
          %s266 = scalar_select %p265, %s264, 3
          %s267 = smul.addr %s266, 8
          %s268 = scalar_lea.vmem %s0, %s267
          %s269 = smul.u32 2, %s22
        $region40: #{tpu_custom_call.1} parent=35 // pred_fallthru
          _
      $region36: #{tpu_custom_call.1} parent=5 // pred_fallthru
        _
      %p270 = scmp.le.s32.totalorder 1, %s22
      %p271 = scmp.lt.s32.totalorder %s22, 3
      %p272 = pnand %p270, %p271
      %p273 = pneg %p272
      // Predicated region
      $region41: #{tpu_custom_call.1} parent=5 // pred_check
        _
      $region42: #{tpu_custom_call.1} parent=5 // pred_check_branch
        %275 = sbr.rel (%p272) target = $region44
      $region43: #{tpu_custom_call.1} parent=5 // pred_region
        %s276 = ssub.s32 %s22, 1
        // Predicated region
        $region45: #{tpu_custom_call.1} parent=43 // pred_check
          %p277 = pneg %p69
        $region46: #{tpu_custom_call.1} parent=43 // pred_check_branch
          %279 = sbr.rel (%p277) target = $region48
        $region47: #{tpu_custom_call.1} parent=43 // pred_region
          %281 = dma.done [#allocation3], 2048
        $region48: #{tpu_custom_call.1} parent=43 // pred_fallthru
          _
        // Predicated region
        $region49: #{tpu_custom_call.1} parent=43 // pred_check
          %p282 = pneg %p132
        $region50: #{tpu_custom_call.1} parent=43 // pred_check_branch
          %284 = sbr.rel (%p282) target = $region52
        $region51: #{tpu_custom_call.1} parent=43 // pred_region
          %286 = dma.done [#allocation6], 1024
        $region52: #{tpu_custom_call.1} parent=43 // pred_fallthru
          _
        %s287 = smul.u32 2, %s27
        %p288 = scmp.lt.s32.totalorder %s287, 3
        %s289 = scalar_select %p288, %s287, 3
        %s290 = smul.addr %s289, 8
        %s291 = scalar_lea.vmem %s0, %s290
        %p292 = pneg %p48
        %p293 = pneg %p45
        %p294 = pneg %p69
        %p295 = pneg %p66
        %p296 = pneg %p90
        %p297 = pneg %p87
        %p298 = pneg %p111
        %p299 = pneg %p108
        %p300 = pneg %p132
        %p301 = pneg %p129
        %p302 = pneg %p153
        %p303 = pneg %p150
        %p304 = pneg %p179
        %p305 = pneg %p176
        %s306 = sand.u32 %s166, 1
        %s307 = scalar_lea.sflag [#allocation4], %s306
        %s308 = sand.u32 %s166, 1
        %s309 = smul.addr %s308, 8
        %s310 = scalar_lea.vmem [#allocation7], %s309
        %p311 = pneg %p205
        %p312 = pneg %p202
        %s313 = sand.u32 %s192, 1
        %s314 = scalar_lea.sflag [#allocation9], %s313
        %s315 = sand.u32 %s192, 1
        %s316 = smul.addr %s315, 8
        %s317 = scalar_lea.vmem [#allocation8], %s316
        %s318 = smul.u32 2, %s27
        %p319 = scmp.lt.s32.totalorder %s318, 3
        %s320 = scalar_select %p319, %s318, 3
        %s321 = smul.addr %s320, 8
        %s322 = scalar_lea.vmem %s0, %s321
        %s323 = smul.u32 2, %s27
        %s324 = smul.u32 2, %s27
        %v325 = vld [vmem:[%s322] sm:$0xff]
        %v326 = vld [vmem:[%s322 + $0x8] sm:$0xff]
        %v327 = vlaneseq
        %v328 = vand.u32 %v327, 127
        %329 = vset.pattern.permute.xlu0 0
        %330 = vperm.xlu0 %329, %v325
        %v331 = vpop.permute.xlu0 %330
        %332 = vset.pattern.permute.xlu0 0
        %333 = vperm.xlu0 %332, %v326
        %v334 = vpop.permute.xlu0 %333
        %vm335 = vcmp.eq.s32.totalorder %v331, %v328
        %vm336 = vcmp.eq.s32.totalorder %v334, %v328
        %v337 = vsel %vm335, 1, 0
        %v338 = vsel %vm336, 1, 0
        %v339 = vcvt.s32.f32 %v337
        %v340 = vcvt.s32.f32 %v338
        %v341 = vpack.c.bf16 %v340, %v339
        %v342 = vld [vmem:[#allocation2] sm:$0xff]
        %v343 = vld [vmem:[#allocation2 + $0x8] sm:$0xff]
        %v344 = vld [vmem:[#allocation2 + $0x10] sm:$0xff]
        %v345 = vld [vmem:[#allocation2 + $0x18] sm:$0xff]
        %v346 = vld [vmem:[#allocation2 + $0x20] sm:$0xff]
        %v347 = vld [vmem:[#allocation2 + $0x28] sm:$0xff]
        %v348 = vld [vmem:[#allocation2 + $0x30] sm:$0xff]
        %v349 = vld [vmem:[#allocation2 + $0x38] sm:$0xff]
        %v350 = vld [vmem:[#allocation2 + $0x40] sm:$0xff]
        %v351 = vld [vmem:[#allocation2 + $0x48] sm:$0xff]
        %v352 = vld [vmem:[#allocation2 + $0x50] sm:$0xff]
        %v353 = vld [vmem:[#allocation2 + $0x58] sm:$0xff]
        %v354 = vld [vmem:[#allocation2 + $0x60] sm:$0xff]
        %v355 = vld [vmem:[#allocation2 + $0x68] sm:$0xff]
        %v356 = vld [vmem:[#allocation2 + $0x70] sm:$0xff]
        %v357 = vld [vmem:[#allocation2 + $0x78] sm:$0xff]
        %v374 = vunpack.c.l.b16 %v342
        %v375 = vunpack.c.h.b16 %v342
        %v376 = vunpack.c.l.b16 %v343
        %v377 = vunpack.c.h.b16 %v343
        %v378 = vunpack.c.l.b16 %v344
        %v379 = vunpack.c.h.b16 %v344
        %v380 = vunpack.c.l.b16 %v345
        %v381 = vunpack.c.h.b16 %v345
        %v382 = vunpack.c.l.b16 %v346
        %v383 = vunpack.c.h.b16 %v346
        %v384 = vunpack.c.l.b16 %v347
        %v385 = vunpack.c.h.b16 %v347
        %v386 = vunpack.c.l.b16 %v348
        %v387 = vunpack.c.h.b16 %v348
        %v388 = vunpack.c.l.b16 %v349
        %v389 = vunpack.c.h.b16 %v349
        %v390 = vunpack.c.l.b16 %v350
        %v391 = vunpack.c.h.b16 %v350
        %v392 = vunpack.c.l.b16 %v351
        %v393 = vunpack.c.h.b16 %v351
        %v394 = vunpack.c.l.b16 %v352
        %v395 = vunpack.c.h.b16 %v352
        %v396 = vunpack.c.l.b16 %v353
        %v397 = vunpack.c.h.b16 %v353
        %v398 = vunpack.c.l.b16 %v354
        %v399 = vunpack.c.h.b16 %v354
        %v400 = vunpack.c.l.b16 %v355
        %v401 = vunpack.c.h.b16 %v355
        %v402 = vunpack.c.l.b16 %v356
        %v403 = vunpack.c.h.b16 %v356
        %v404 = vunpack.c.l.b16 %v357
        %v405 = vunpack.c.h.b16 %v357
        %v406 = vpack.c.b16 %v376, %v374
        %v407 = vpack.c.b16 %v377, %v375
        %v408 = vpack.c.b16 %v380, %v378
        %v409 = vpack.c.b16 %v381, %v379
        %v410 = vpack.c.b16 %v384, %v382
        %v411 = vpack.c.b16 %v385, %v383
        %v412 = vpack.c.b16 %v388, %v386
        %v413 = vpack.c.b16 %v389, %v387
        %v414 = vpack.c.b16 %v392, %v390
        %v415 = vpack.c.b16 %v393, %v391
        %v416 = vpack.c.b16 %v396, %v394
        %v417 = vpack.c.b16 %v397, %v395
        %v418 = vpack.c.b16 %v400, %v398
        %v419 = vpack.c.b16 %v401, %v399
        %v420 = vpack.c.b16 %v404, %v402
        %v421 = vpack.c.b16 %v405, %v403
        %438 = vmatpush.bf16.msra.mxu0 %v420
        %439 = vmatpush.bf16.msra.mxu0 %v418
        %440 = vmatpush.bf16.msra.mxu0 %v416
        %441 = vmatpush.bf16.msra.mxu0 %v414
        %442 = vmatpush.bf16.msra.mxu0 %v412
        %443 = vmatpush.bf16.msra.mxu0 %v410
        %444 = vmatpush.bf16.msra.mxu0 %v408
        %445 = vmatpush.bf16.msra.mxu0 %v406
        %446 = vmatmul.bf16.gmra.mxu0 %v341
        %v447 = vpop.f32.mrf.mxu0
        %v448 = vadd.f32 0.0, %v447
        %v449 = vpop.f32.mrf.mxu0
        %v450 = vadd.f32 0.0, %v449
        %451 = vdwg.mxu0
        %452 = vmatpush.bf16.msra.mxu0 %v421
        %453 = vmatpush.bf16.msra.mxu0 %v419
        %454 = vmatpush.bf16.msra.mxu0 %v417
        %455 = vmatpush.bf16.msra.mxu0 %v415
        %456 = vmatpush.bf16.msra.mxu0 %v413
        %457 = vmatpush.bf16.msra.mxu0 %v411
        %458 = vmatpush.bf16.msra.mxu0 %v409
        %459 = vmatpush.bf16.msra.mxu0 %v407
        %460 = vmatmul.bf16.gmra.mxu0 %v341
        %v461 = vpop.f32.mrf.mxu0
        %v462 = vadd.f32 0.0, %v461
        %v463 = vpop.f32.mrf.mxu0
        %v464 = vadd.f32 0.0, %v463
        %465 = vdwg.mxu0
        %v466 = vadd.f32 %v448, %v450
        %v467 = vrot.slane %v466, 4
        %v468 = vadd.f32 %v466, %v467
        %v469 = vrot.slane %v468, 2
        %v470 = vadd.f32 %v468, %v469
        %v471 = vrot.slane %v470, 1
        %v472 = vadd.f32 %v470, %v471
        %473 = vst [vmem:[%s317] sm:$0xff] %v472
        %474 = vadd.xlane.f32.xlu0 %v462
        %v475 = vpop.xlane.xlu0 %474
        %476 = vadd.xlane.f32.xlu0 %v464
        %v477 = vpop.xlane.xlu0 %476
        %v478 = vrcp.pop 128.0
        %v479 = vmul.f32 128.0, %v478
        %v480 = vsub.f32 1.0, %v479
        %v481 = vmul.f32 %v478, %v480
        %v482 = vadd.f32 %v478, %v481
        %vm483 = vweird.f32 %v478
        %v484 = vsel %vm483, %v478, %v482
        %v485 = vmul.f32 %v475, %v484
        %v486 = vmul.f32 %v477, %v484
        %v487 = vsub.f32 %v462, %v485
        %v488 = vsub.f32 %v464, %v486
        %v489 = vmul.f32 %v487, %v487
        %v490 = vmul.f32 %v488, %v488
        %491 = vadd.xlane.f32.xlu0 %v489
        %v492 = vpop.xlane.xlu0 %491
        %493 = vadd.xlane.f32.xlu0 %v490
        %v494 = vpop.xlane.xlu0 %493
        %v495 = vmul.f32 %v492, %v484
        %v496 = vmul.f32 %v494, %v484
        %v497 = vadd.f32 %v495, 1e-05
        %v498 = vadd.f32 %v496, 1e-05
        %v499 = vrsqrt.pop %v497
        %v500 = vmul.f32 %v499, %v497
        %v501 = vmul.f32 %v500, %v499
        %v502 = vmul.f32 0.5, %v501
        %v503 = vsub.f32 1.5, %v502
        %v504 = vmul.f32 %v499, %v503
        %vm505 = vweird.f32 %v497
        %vm506 = vweird.f32 %v499
        %vm507 = vmor %vm505, %vm506
        %v508 = vsel %vm507, %v499, %v504
        %v509 = vrsqrt.pop %v498
        %v510 = vmul.f32 %v509, %v498
        %v511 = vmul.f32 %v510, %v509
        %v512 = vmul.f32 0.5, %v511
        %v513 = vsub.f32 1.5, %v512
        %v514 = vmul.f32 %v509, %v513
        %vm515 = vweird.f32 %v498
        %vm516 = vweird.f32 %v509
        %vm517 = vmor %vm515, %vm516
        %v518 = vsel %vm517, %v509, %v514
        %v519 = vmul.f32 %v487, %v508
        %v520 = vmul.f32 %v488, %v518
        %v521 = vld [vmem:[%s2] sm:$0x1]
        %v523 = vperm.slane %v521, 0
        %v525 = vmul.f32 %v519, %v523
        %v526 = vmul.f32 %v520, %v523
        %v527 = vld [vmem:[%s3] sm:$0x1]
        %v529 = vperm.slane %v527, 0
        %v531 = vadd.f32 %v525, %v529
        %v532 = vadd.f32 %v526, %v529
        %v533 = vpack.c.bf16 %v532, %v531
        %v534 = vld [vmem:[#allocation5] sm:$0xf]
        %v535 = vld [vmem:[#allocation5 + $0x4] sm:$0xf]
        %v536 = vld [vmem:[#allocation5 + $0x8] sm:$0xf]
        %v537 = vld [vmem:[#allocation5 + $0xc] sm:$0xf]
        %v538 = vld [vmem:[#allocation5 + $0x10] sm:$0xf]
        %v539 = vld [vmem:[#allocation5 + $0x14] sm:$0xf]
        %v540 = vld [vmem:[#allocation5 + $0x18] sm:$0xf]
        %v541 = vld [vmem:[#allocation5 + $0x1c] sm:$0xf]
        %v542 = vld [vmem:[#allocation5 + $0x20] sm:$0xf]
        %v543 = vld [vmem:[#allocation5 + $0x24] sm:$0xf]
        %v544 = vld [vmem:[#allocation5 + $0x28] sm:$0xf]
        %v545 = vld [vmem:[#allocation5 + $0x2c] sm:$0xf]
        %v546 = vld [vmem:[#allocation5 + $0x30] sm:$0xf]
        %v547 = vld [vmem:[#allocation5 + $0x34] sm:$0xf]
        %v548 = vld [vmem:[#allocation5 + $0x38] sm:$0xf]
        %v549 = vld [vmem:[#allocation5 + $0x3c] sm:$0xf]
        %v550 = vld [vmem:[%s5] sm:$0x1]
        %v552 = vperm.slane %v550, 0
        %v570 = vunpack.c.l.b16 %v534
        %v571 = vunpack.c.l.b16 %v535
        %v572 = vunpack.c.l.b16 %v536
        %v573 = vunpack.c.l.b16 %v537
        %v574 = vunpack.c.l.b16 %v538
        %v575 = vunpack.c.l.b16 %v539
        %v576 = vunpack.c.l.b16 %v540
        %v577 = vunpack.c.l.b16 %v541
        %v578 = vunpack.c.l.b16 %v542
        %v579 = vunpack.c.l.b16 %v543
        %v580 = vunpack.c.l.b16 %v544
        %v581 = vunpack.c.l.b16 %v545
        %v582 = vunpack.c.l.b16 %v546
        %v583 = vunpack.c.l.b16 %v547
        %v584 = vunpack.c.l.b16 %v548
        %v585 = vunpack.c.l.b16 %v549
        %v586 = vpack.c.b16 %v571, %v570
        %v587 = vpack.c.b16 %v573, %v572
        %v588 = vpack.c.b16 %v575, %v574
        %v589 = vpack.c.b16 %v577, %v576
        %v590 = vpack.c.b16 %v579, %v578
        %v591 = vpack.c.b16 %v581, %v580
        %v592 = vpack.c.b16 %v583, %v582
        %v593 = vpack.c.b16 %v585, %v584
        %602 = vmatpush.bf16.msra.mxu0 %v593
        %603 = vmatpush.bf16.msra.mxu0 %v592
        %604 = vmatpush.bf16.msra.mxu0 %v591
        %605 = vmatpush.bf16.msra.mxu0 %v590
        %606 = vmatpush.bf16.msra.mxu0 %v589
        %607 = vmatpush.bf16.msra.mxu0 %v588
        %608 = vmatpush.bf16.msra.mxu0 %v587
        %609 = vmatpush.bf16.msra.mxu0 %v586
        %610 = vmatmul.bf16.gmra.mxu0 %v533
        %v611 = vpop.f32.mrf.mxu0
        %v612 = vadd.f32 %v552, %v611
        %v613 = vpop.f32.mrf.mxu0
        %v614 = vadd.f32 %v552, %v613
        %615 = vdwg.mxu0
        %v616 = vmax.f32 %v612, 0.0
        %v617 = vmax.f32 %v614, 0.0
        %v618 = vpack.c.bf16 %v616, %v616
        %v619 = vpack.c.bf16 %v617, %v617
        %620 = vst [vmem:[%s310] sm:$0xf] %v618
        %621 = vst [vmem:[%s310 + $0x4] sm:$0xf] %v619
        %s622 = sand.u32 %s166, 1
        %s623 = scalar_lea.sflag [#allocation4], %s622
        %s624 = sand.u32 %s166, 1
        %s625 = smul.addr %s624, 8
        %s626 = scalar_lea.vmem [#allocation7], %s625
        %s627 = sand.u32 %s192, 1
        %s628 = scalar_lea.sflag [#allocation9], %s627
        %s629 = sand.u32 %s192, 1
        %s630 = smul.addr %s629, 8
        %s631 = scalar_lea.vmem [#allocation8], %s630
        // Predicated region
        $region53: #{tpu_custom_call.1} parent=43 // pred_check
          %p632 = pneg %p176
        $region54: #{tpu_custom_call.1} parent=43 // pred_check_branch
          %634 = sbr.rel (%p632) target = $region56
        $region55: #{tpu_custom_call.1} parent=43 // pred_region
          %s635 = smul.u32 2, %s27
          %637 = vsyncadd %s623, 0
          %s638 = smul.addr %s635, 4
          %s639 = scalar_lea.hbm %s6, %s638
          %s640 = sshll.u32 %s626, 4
          %s641 = int_to_ptr.vmem [resolvable:$true] %s640
          %s642 = sshll.u32 %s639, 4
          %s643 = int_to_ptr.hbm [resolvable:$true] %s642
          %648 = dma.vmem_to_hbm [thread:$0]  %s641, 128, %s643, %s623, 64, 64, 4
        $region56: #{tpu_custom_call.1} parent=43 // pred_fallthru
          _
        // Predicated region
        $region57: #{tpu_custom_call.1} parent=43 // pred_check
          %p649 = pneg %p202
        $region58: #{tpu_custom_call.1} parent=43 // pred_check_branch
          %651 = sbr.rel (%p649) target = $region60
        $region59: #{tpu_custom_call.1} parent=43 // pred_region
          %653 = vsyncadd %s628, 0
          %s654 = smul.addr %s27, 8
          %s655 = scalar_lea.hbm %s7, %s654
          %s657 = sshll.u32 %s631, 4
          %s658 = int_to_ptr.vmem [resolvable:$true] %s657
          %s659 = sshll.u32 %s655, 4
          %s660 = int_to_ptr.hbm [resolvable:$true] %s659
          %662 = dma.vmem_to_hbm [thread:$0]  %s658, 128, %s660, %s628
        $region60: #{tpu_custom_call.1} parent=43 // pred_fallthru
          _
      $region44: #{tpu_custom_call.1} parent=5 // pred_fallthru
        _
      %p663 = scmp.le.s32.totalorder 2, %s22
      // Predicated region
      $region61: #{tpu_custom_call.1} parent=5 // pred_check
        %p664 = pneg %p663
      $region62: #{tpu_custom_call.1} parent=5 // pred_check_branch
        %666 = sbr.rel (%p664) target = $region64
      $region63: #{tpu_custom_call.1} parent=5 // pred_region
        %s667 = ssub.s32 %s22, 2
        // Predicated region
        $region65: #{tpu_custom_call.1} parent=63 // pred_check
          %p668 = pneg %p182
        $region66: #{tpu_custom_call.1} parent=63 // pred_check_branch
          %670 = sbr.rel (%p668) target = $region68
        $region67: #{tpu_custom_call.1} parent=63 // pred_region
          %s671 = sand.u32 %s167, 1
          %s672 = scalar_lea.sflag [#allocation4], %s671
          %s673 = sand.u32 %s167, 1
          %s674 = smul.addr %s673, 8
          %s675 = scalar_lea.vmem [#allocation7], %s674
          %677 = dma.done %s672, 128
        $region68: #{tpu_custom_call.1} parent=63 // pred_fallthru
          _
        // Predicated region
        $region69: #{tpu_custom_call.1} parent=63 // pred_check
          %p678 = pneg %p208
        $region70: #{tpu_custom_call.1} parent=63 // pred_check_branch
          %680 = sbr.rel (%p678) target = $region72
        $region71: #{tpu_custom_call.1} parent=63 // pred_region
          %s681 = sand.u32 %s193, 1
          %s682 = scalar_lea.sflag [#allocation9], %s681
          %s683 = sand.u32 %s193, 1
          %s684 = smul.addr %s683, 8
          %s685 = scalar_lea.vmem [#allocation8], %s684
          %687 = dma.done %s682, 128
        $region72: #{tpu_custom_call.1} parent=63 // pred_fallthru
          _
      $region64: #{tpu_custom_call.1} parent=5 // pred_fallthru
        _
    $region6: #{tpu_custom_call.1} parent=1 // loop_footer
      %s26 = sadd.s32 1, %s22
    $region7: #{tpu_custom_call.1} parent=1 // loop_footer_branch
      %21 = sbr.rel target = $region3
    $region8: #{tpu_custom_call.1} parent=1 // loop_exit
      _
    %688 = vsyncpa [#allocation3], 1
    %s689 = scalar_lea.sflag [#allocation3], 1
    %690 = vsyncpa %s689, 1
    %691 = vsyncpa [#allocation6], 1
    %692 = vsyncpa [#allocation4], 1
    %s693 = scalar_lea.sflag [#allocation4], 1
    %694 = vsyncpa %s693, 1
    %695 = vsyncpa [#allocation9], 1
    %s696 = scalar_lea.sflag [#allocation9], 1
    %697 = vsyncpa %s696, 1

</llo_original>
